<compile_context>
chip_gen: v7x
topology: tpu7x:2x2x1
jax: 0.10.0
libtpu: 0.0.40
codegen_flags: <defaults>
</compile_context>

<pallas_src>
import functools

import jax
import jax.numpy as jnp
from jax.experimental import pallas as pl
from jax.experimental.pallas import tpu as pltpu

D_IN, H1, H2, D_OUT = 6, 32, 16, 1

_LANE = 128          # lane width: batch tiles are multiples of this
_CHUNK = 8192        # in-kernel compute sub-chunk (lanes); bounds h1/h2 VMEM live ranges

# Prefer CORE_PARALLEL (explicit per-TensorCore sharding, ~2x on v7x); fall back to "parallel"
# if this jax/backend combination rejects it.  The working choice is cached after the first call.
_CORE_PARALLEL = getattr(pltpu, "CORE_PARALLEL", None)
_SEM_CANDIDATES = tuple(s for s in (_CORE_PARALLEL, "parallel") if s is not None)
_chosen_semantics = None


def _ceil_to(x, m):
    return ((x + m - 1) // m) * m


def _tile_sizes(batch, max_tb):
    """Pick (TB, chunk, padded_B): TB multiple of 128 (and of chunk when TB > chunk)."""
    max_tb = max(_CHUNK, (max_tb // _CHUNK) * _CHUNK)   # keep max_tb a chunk multiple
    padded_lane = _ceil_to(batch, _LANE)
    if padded_lane <= _CHUNK:
        tb = padded_lane
    else:
        # Balance tiles across grid steps, rounded up to a chunk multiple, capped at max_tb.
        g = -(-padded_lane // max_tb)
        tb = min(max_tb, _ceil_to(-(-padded_lane // g), _CHUNK))
    chunk = min(_CHUNK, tb)
    padded_b = _ceil_to(batch, tb)
    return tb, chunk, padded_b


def _vmem_limit_bytes(tb, chunk):
    """Scoped-VMEM request with headroom; 32 MiB floor (safe on every generation,
    raises v5e's 16 MiB default), 48 MiB ceiling (comfortably under v7x's 64 MiB physical)."""
    io = 2 * (8 * tb * 2) + 2 * (8 * tb * 4)       # double-buffered x (bf16) + out (f32), 8-sublane padded
    per_chunk = chunk * 368                        # h1 f32+bf16, h2 f32, h2*w3, h3/sigmoid, x view
    est = io + 3 * per_chunk + (1 << 16)           # assume a few chunk bodies live at once + weights
    return int(min(48 << 20, max(32 << 20, 2 * est)))


def _mlp_kernel(x_ref, w1_ref, b1_ref, w2_ref, b2_ref, w3_ref, b3_ref, o_ref, *, chunk):
    # Batch lives on the lane axis: x_ref is bf16 [6, TB], o_ref is f32 [1, TB].
    n_chunks = x_ref.shape[1] // chunk

    w1 = w1_ref[...]    # bf16 [32, 6]
    b1 = b1_ref[...]    # f32  [32, 1]
    w2 = w2_ref[...]    # bf16 [16, 32]
    b2 = b2_ref[...]    # f32  [16, 1]
    w3 = w3_ref[...]    # f32  [16, 1]  (layer 3 runs on VPU + XLU, not the MXU)
    b3 = b3_ref[...]    # f32  [1, 1]

    # Statically unrolled chunk loop (same code as lax.fori_loop(..., unroll=True)); static,
    # 128-aligned lane slices keep lowering simple and bound h1/h2 live ranges to one chunk
    # regardless of how large the DMA tile TB is.
    for c in range(n_chunks):
        sl = slice(c * chunk, (c + 1) * chunk)
        x = x_ref[:, sl]                                                   # bf16 [6, chunk]

        # Layer 1: Linear(6 -> 32) + ReLU.  bf16 MXU operands, f32 accumulation.
        h1 = jnp.dot(w1, x, preferred_element_type=jnp.float32) + b1
        h1 = jnp.maximum(h1, 0.0)
        # Dropout(0.2) is identity at inference.

        # Layer 2: Linear(32 -> 16) + ReLU.
        h2 = jnp.dot(w2, h1.astype(jnp.bfloat16),
                     preferred_element_type=jnp.float32) + b2
        h2 = jnp.maximum(h2, 0.0)

        # Layer 3: Linear(16 -> 1) + Sigmoid.  VPU multiply + sublane (XLU) reduce keeps the
        # MXU free of M=1 pushes; exp/reciprocal of the sigmoid land on the EUP slot.
        h3 = jnp.sum(h2 * w3, axis=0, keepdims=True) + b3
        o_ref[:, sl] = jax.nn.sigmoid(h3).astype(o_ref.dtype)


def prepare_params(params):
    """One-time parameter relayout: W stored [out, in] in bf16 (MXU-native), biases as f32
    columns, layer-3 weight as an f32 [16, 1] column for the VPU path."""
    w1, b1, w2, b2, w3, b3 = params
    return (
        jnp.asarray(w1, jnp.float32).T.astype(jnp.bfloat16),   # [32, 6]
        jnp.asarray(b1, jnp.float32).reshape(H1, 1),
        jnp.asarray(w2, jnp.float32).T.astype(jnp.bfloat16),   # [16, 32]
        jnp.asarray(b2, jnp.float32).reshape(H2, 1),
        jnp.asarray(w3, jnp.float32).reshape(H2, D_OUT),       # [16, 1] f32
        jnp.asarray(b3, jnp.float32).reshape(D_OUT, 1),
    )


def _pallas_forward(feat, kp, *, tb, chunk, semantics):
    _, padded_b = feat.shape
    grid = (padded_b // tb,)

    def const(shape):
        # Constant index_map -> fetched once, VMEM-resident across all grid steps.
        return pl.BlockSpec(shape, lambda i: (0, 0))

    return pl.pallas_call(
        functools.partial(_mlp_kernel, chunk=chunk),
        out_shape=jax.ShapeDtypeStruct((D_OUT, padded_b), jnp.float32),
        grid=grid,
        in_specs=[
            pl.BlockSpec((D_IN, tb), lambda i: (0, i)),   # x tile, batch on lanes (bf16)
            const((H1, D_IN)), const((H1, 1)),
            const((H2, H1)), const((H2, 1)),
            const((H2, D_OUT)), const((D_OUT, 1)),
        ],
        out_specs=pl.BlockSpec((D_OUT, tb), lambda i: (0, i)),
        compiler_params=pltpu.CompilerParams(
            dimension_semantics=(semantics,),
            vmem_limit_bytes=_vmem_limit_bytes(tb, chunk),
        ),
        cost_estimate=pl.CostEstimate(
            flops=2 * padded_b * (D_IN * H1 + H1 * H2 + H2 * D_OUT),
            transcendentals=2 * padded_b,                       # sigmoid = exp + reciprocal
            bytes_accessed=(padded_b * (D_IN * 2 + D_OUT * 4)   # bf16 x in, f32 probs out
                            + (H1 * D_IN + H2 * H1) * 2         # bf16 weights
                            + (H2 * D_OUT + H1 + H2 + D_OUT) * 4),
        ),
    )(feat, *kp)


def session_classifier_forward_soa(features, params, *, max_tb=65536):
    """features: [6, B] (SoA, batch on lanes; ideally already bf16) -> [B] probabilities.

    Preferred zero-relayout entry point: callers that store features feature-major skip the
    transpose/pad HBM pass entirely."""
    global _chosen_semantics
    assert features.shape[0] == D_IN, features.shape
    batch = features.shape[1]

    tb, chunk, padded_b = _tile_sizes(batch, max_tb)

    feat = features.astype(jnp.bfloat16)          # no-op if caller already supplies bf16
    if padded_b != batch:
        feat = jnp.pad(feat, ((0, 0), (0, padded_b - batch)))

    kp = prepare_params(params)

    candidates = (_chosen_semantics,) if _chosen_semantics is not None else _SEM_CANDIDATES
    last_err = None
    for sem in candidates:
        try:
            out = _pallas_forward(feat, kp, tb=tb, chunk=chunk, semantics=sem)
            _chosen_semantics = sem
            break
        except Exception as e:  # noqa: BLE001 - fall back if this backend rejects CORE_PARALLEL
            last_err = e
    else:
        raise last_err

    return out[0, :batch]                          # [B] probabilities


def session_classifier_forward(x, params, *, max_tb=65536):
    """PyTorch-layout entry: x [B, 6] float -> [B, 1] probabilities.

    Performs a single fused transpose+cast (AoS f32 -> SoA bf16).  If the SoA/bf16 layout can be
    pushed upstream, call session_classifier_forward_soa directly and skip this copy."""
    features = jnp.transpose(x).astype(jnp.bfloat16)   # [6, B] bf16 (cast fused into the copy)
    probs = session_classifier_forward_soa(features, params, max_tb=max_tb)
    return probs[:, None]


def init_params(key):
    """Deterministic init mimicking PyTorch Linear default (uniform +/- 1/sqrt(fan_in))."""
    dims = [(D_IN, H1), (H1, H2), (H2, D_OUT)]
    params = []
    for i, (fan_in, fan_out) in enumerate(dims):
        kw, kb = jax.random.split(jax.random.fold_in(key, i))
        bound = 1.0 / (fan_in ** 0.5)
        w = jax.random.uniform(kw, (fan_in, fan_out), jnp.float32, -bound, bound)
        b = jax.random.uniform(kb, (1, fan_out), jnp.float32, -bound, bound)
        params += [w, b]
    return tuple(params)


def _reference_f32(x, params):
    w1, b1, w2, b2, w3, b3 = params
    h = jnp.maximum(x @ w1 + b1, 0.0)
    h = jnp.maximum(h @ w2 + b2, 0.0)
    return jax.nn.sigmoid(h @ w3 + b3)


def _reference_bf16(x, params):
    """Reference with the same explicit precision choices as the kernel (bf16 MXU, f32 accum)."""
    w1, b1, w2, b2, w3, b3 = params
    h = jnp.dot(x.astype(jnp.bfloat16), w1.astype(jnp.bfloat16),
                preferred_element_type=jnp.float32) + b1
    h = jnp.maximum(h, 0.0)
    h = jnp.dot(h.astype(jnp.bfloat16), w2.astype(jnp.bfloat16),
                preferred_element_type=jnp.float32) + b2
    h = jnp.maximum(h, 0.0)
    return jax.nn.sigmoid(jnp.dot(h, w3) + b3)


if __name__ == "__main__":
    key = jax.random.PRNGKey(0)
    params = init_params(key)

    for batch in (8, 300):   # both ragged: exercise lane padding + slice-back
        x = jax.random.normal(jax.random.fold_in(key, batch), (batch, D_IN), dtype=jnp.float32)

        out = jax.block_until_ready(session_classifier_forward(x, params))
        assert out.shape == (batch, 1), out.shape
        assert bool(jnp.all(jnp.isfinite(out))), "non-finite outputs"
        assert bool(jnp.all((out >= 0.0) & (out <= 1.0))), "probabilities out of range"

        # Apples-to-apples check (same bf16-operand / f32-accumulate precision as the kernel).
        ref_bf16 = _reference_bf16(x, params)
        assert jnp.allclose(out, ref_bf16, atol=5e-3, rtol=5e-3), (
            float(jnp.max(jnp.abs(out - ref_bf16))))

        # Loose sanity bound against the full-f32 reference (bf16 MXU operands are intentional).
        ref_f32 = _reference_f32(x, params)
        assert jnp.allclose(out, ref_f32, atol=5e-2, rtol=5e-2), (
            float(jnp.max(jnp.abs(out - ref_f32))))

    print("KERNEL_OK")
</pallas_src>

<mosaic_0001>
module attributes {stable_mosaic.version = 11 : i64} {
  func.func @_mlp_kernel(%arg0: i32, %arg1: memref<6x128xbf16, #tpu.memory_space<vmem>>, %arg2: memref<32x6xbf16, #tpu.memory_space<vmem>>, %arg3: memref<32x1xf32, #tpu.memory_space<vmem>>, %arg4: memref<16x32xbf16, #tpu.memory_space<vmem>>, %arg5: memref<16x1xf32, #tpu.memory_space<vmem>>, %arg6: memref<16x1xf32, #tpu.memory_space<vmem>>, %arg7: memref<1x1xf32, #tpu.memory_space<vmem>>, %arg8: memref<1x128xf32, #tpu.memory_space<vmem>>) attributes {dimension_semantics = [#tpu.dimension_semantics<core_parallel>], iteration_bounds = array<i64: 1>, scalar_prefetch = 0 : i64, scratch_operands = 0 : i64, tpu.core_type = #tpu.core_type<tc>, window_params = [{transform_indices = @transform_0, window_bounds = array<i64: 6, 128>}, {pipeline_mode = #tpu.pipeline_mode<synchronous>, transform_indices = @transform_1, window_bounds = array<i64: 32, 6>}, {pipeline_mode = #tpu.pipeline_mode<synchronous>, transform_indices = @transform_2, window_bounds = array<i64: 32, 1>}, {pipeline_mode = #tpu.pipeline_mode<synchronous>, transform_indices = @transform_3, window_bounds = array<i64: 16, 32>}, {pipeline_mode = #tpu.pipeline_mode<synchronous>, transform_indices = @transform_4, window_bounds = array<i64: 16, 1>}, {pipeline_mode = #tpu.pipeline_mode<synchronous>, transform_indices = @transform_5, window_bounds = array<i64: 16, 1>}, {pipeline_mode = #tpu.pipeline_mode<synchronous>, transform_indices = @transform_6, window_bounds = array<i64: 1, 1>}, {transform_indices = @transform_7, window_bounds = array<i64: 1, 128>}]} {
    %c0 = arith.constant 0 : index
    %c0_0 = arith.constant 0 : index
    %0 = vector.load %arg2[%c0, %c0_0] : memref<32x6xbf16, #tpu.memory_space<vmem>>, vector<32x6xbf16>
    %c0_1 = arith.constant 0 : index
    %c0_2 = arith.constant 0 : index
    %1 = vector.load %arg3[%c0_1, %c0_2] : memref<32x1xf32, #tpu.memory_space<vmem>>, vector<32x1xf32>
    %c0_3 = arith.constant 0 : index
    %c0_4 = arith.constant 0 : index
    %2 = vector.load %arg4[%c0_3, %c0_4] : memref<16x32xbf16, #tpu.memory_space<vmem>>, vector<16x32xbf16>
    %c0_5 = arith.constant 0 : index
    %c0_6 = arith.constant 0 : index
    %3 = vector.load %arg5[%c0_5, %c0_6] : memref<16x1xf32, #tpu.memory_space<vmem>>, vector<16x1xf32>
    %c0_7 = arith.constant 0 : index
    %c0_8 = arith.constant 0 : index
    %4 = vector.load %arg6[%c0_7, %c0_8] : memref<16x1xf32, #tpu.memory_space<vmem>>, vector<16x1xf32>
    %c0_9 = arith.constant 0 : index
    %c0_10 = arith.constant 0 : index
    %5 = vector.load %arg7[%c0_9, %c0_10] : memref<1x1xf32, #tpu.memory_space<vmem>>, vector<1x1xf32>
    %c0_11 = arith.constant 0 : index
    %c0_12 = arith.constant 0 : index
    %6 = vector.load %arg1[%c0_11, %c0_12] : memref<6x128xbf16, #tpu.memory_space<vmem>>, vector<6x128xbf16>
    %cst = arith.constant dense<0.000000e+00> : vector<32x128xf32>
    %7 = tpu.matmul %0, %6, %cst {dimension_numbers = #tpu.dot_dimension_numbers<[1], [0], [0], [1], [0, 0, 1, 1], [], []>} : vector<32x6xbf16>, vector<6x128xbf16>, vector<32x128xf32> -> vector<32x128xf32>
    %8 = vector.broadcast %1 : vector<32x1xf32> to vector<32x128xf32>
    %9 = arith.addf %7, %8 : vector<32x128xf32>
    %cst_13 = arith.constant 0.000000e+00 : f32
    %10 = vector.broadcast %cst_13 : f32 to vector<32x128xf32>
    %11 = arith.maximumf %9, %10 : vector<32x128xf32>
    %12 = arith.truncf %11 : vector<32x128xf32> to vector<32x128xbf16>
    %cst_14 = arith.constant dense<0.000000e+00> : vector<16x128xf32>
    %13 = tpu.matmul %2, %12, %cst_14 {dimension_numbers = #tpu.dot_dimension_numbers<[1], [0], [0], [1], [0, 0, 1, 1], [], []>} : vector<16x32xbf16>, vector<32x128xbf16>, vector<16x128xf32> -> vector<16x128xf32>
    %14 = vector.broadcast %3 : vector<16x1xf32> to vector<16x128xf32>
    %15 = arith.addf %13, %14 : vector<16x128xf32>
    %cst_15 = arith.constant 0.000000e+00 : f32
    %16 = vector.broadcast %cst_15 : f32 to vector<16x128xf32>
    %17 = arith.maximumf %15, %16 : vector<16x128xf32>
    %18 = vector.broadcast %4 : vector<16x1xf32> to vector<16x128xf32>
    %19 = arith.mulf %17, %18 : vector<16x128xf32>
    %cst_16 = arith.constant dense<0.000000e+00> : vector<128xf32>
    %20 = vector.multi_reduction <add>, %19, %cst_16 [0] : vector<16x128xf32> to vector<128xf32>
    %21 = vector.shape_cast %20 : vector<128xf32> to vector<1x128xf32>
    %22 = vector.broadcast %5 : vector<1x1xf32> to vector<1x128xf32>
    %23 = arith.addf %21, %22 : vector<1x128xf32>
    %24 = arith.negf %23 : vector<1x128xf32>
    %25 = math.exp %24 : vector<1x128xf32>
    %cst_17 = arith.constant 1.000000e+00 : f32
    %26 = vector.broadcast %cst_17 : f32 to vector<1x128xf32>
    %27 = arith.addf %26, %25 : vector<1x128xf32>
    %28 = arith.divf %26, %27 : vector<1x128xf32>
    %c0_18 = arith.constant 0 : index
    %c0_19 = arith.constant 0 : index
    %29 = vector.load %arg8[%c0_18, %c0_19] : memref<1x128xf32, #tpu.memory_space<vmem>>, vector<1x128xf32>
    tpu.vector_store %arg8[%c0_18, %c0_19], %28 {strides = array<i32>} : memref<1x128xf32, #tpu.memory_space<vmem>>, vector<1x128xf32>,
    return
  }
  func.func @transform_0(%arg0: i32) -> (i32, i32) {
    %c0_i32 = arith.constant 0 : i32
    %c0_i32_0 = arith.constant 0 : i32
    return %c0_i32, %arg0 : i32, i32
  }
  func.func @transform_1(%arg0: i32) -> (i32, i32) {
    %c0_i32 = arith.constant 0 : i32
    %c0_i32_0 = arith.constant 0 : i32
    %c0_i32_1 = arith.constant 0 : i32
    return %c0_i32, %c0_i32_0 : i32, i32
  }
  func.func @transform_2(%arg0: i32) -> (i32, i32) {
    %c0_i32 = arith.constant 0 : i32
    %c0_i32_0 = arith.constant 0 : i32
    %c0_i32_1 = arith.constant 0 : i32
    return %c0_i32, %c0_i32_0 : i32, i32
  }
  func.func @transform_3(%arg0: i32) -> (i32, i32) {
    %c0_i32 = arith.constant 0 : i32
    %c0_i32_0 = arith.constant 0 : i32
    %c0_i32_1 = arith.constant 0 : i32
    return %c0_i32, %c0_i32_0 : i32, i32
  }
  func.func @transform_4(%arg0: i32) -> (i32, i32) {
    %c0_i32 = arith.constant 0 : i32
    %c0_i32_0 = arith.constant 0 : i32
    %c0_i32_1 = arith.constant 0 : i32
    return %c0_i32, %c0_i32_0 : i32, i32
  }
  func.func @transform_5(%arg0: i32) -> (i32, i32) {
    %c0_i32 = arith.constant 0 : i32
    %c0_i32_0 = arith.constant 0 : i32
    %c0_i32_1 = arith.constant 0 : i32
    return %c0_i32, %c0_i32_0 : i32, i32
  }
  func.func @transform_6(%arg0: i32) -> (i32, i32) {
    %c0_i32 = arith.constant 0 : i32
    %c0_i32_0 = arith.constant 0 : i32
    %c0_i32_1 = arith.constant 0 : i32
    return %c0_i32, %c0_i32_0 : i32, i32
  }
  func.func @transform_7(%arg0: i32) -> (i32, i32) {
    %c0_i32 = arith.constant 0 : i32
    %c0_i32_0 = arith.constant 0 : i32
    return %c0_i32, %arg0 : i32, i32
  }
}

module attributes {stable_mosaic.version = 11 : i64} {
  func.func @_mlp_kernel(%arg0: i32, %arg1: memref<6x128xbf16, #tpu.memory_space<vmem>>, %arg2: memref<32x6xbf16, #tpu.memory_space<vmem>>, %arg3: memref<32x1xf32, #tpu.memory_space<vmem>>, %arg4: memref<16x32xbf16, #tpu.memory_space<vmem>>, %arg5: memref<16x1xf32, #tpu.memory_space<vmem>>, %arg6: memref<16x1xf32, #tpu.memory_space<vmem>>, %arg7: memref<1x1xf32, #tpu.memory_space<vmem>>, %arg8: memref<1x128xf32, #tpu.memory_space<vmem>>) attributes {dimension_semantics = [#tpu.dimension_semantics<parallel>], iteration_bounds = array<i64: 1>, scalar_prefetch = 0 : i64, scratch_operands = 0 : i64, tpu.core_type = #tpu.core_type<tc>, window_params = [{transform_indices = @transform_0, window_bounds = array<i64: 6, 128>}, {pipeline_mode = #tpu.pipeline_mode<synchronous>, transform_indices = @transform_1, window_bounds = array<i64: 32, 6>}, {pipeline_mode = #tpu.pipeline_mode<synchronous>, transform_indices = @transform_2, window_bounds = array<i64: 32, 1>}, {pipeline_mode = #tpu.pipeline_mode<synchronous>, transform_indices = @transform_3, window_bounds = array<i64: 16, 32>}, {pipeline_mode = #tpu.pipeline_mode<synchronous>, transform_indices = @transform_4, window_bounds = array<i64: 16, 1>}, {pipeline_mode = #tpu.pipeline_mode<synchronous>, transform_indices = @transform_5, window_bounds = array<i64: 16, 1>}, {pipeline_mode = #tpu.pipeline_mode<synchronous>, transform_indices = @transform_6, window_bounds = array<i64: 1, 1>}, {transform_indices = @transform_7, window_bounds = array<i64: 1, 128>}]} {
    %c0 = arith.constant 0 : index
    %c0_0 = arith.constant 0 : index
    %0 = vector.load %arg2[%c0, %c0_0] : memref<32x6xbf16, #tpu.memory_space<vmem>>, vector<32x6xbf16>
    %c0_1 = arith.constant 0 : index
    %c0_2 = arith.constant 0 : index
    %1 = vector.load %arg3[%c0_1, %c0_2] : memref<32x1xf32, #tpu.memory_space<vmem>>, vector<32x1xf32>
    %c0_3 = arith.constant 0 : index
    %c0_4 = arith.constant 0 : index
    %2 = vector.load %arg4[%c0_3, %c0_4] : memref<16x32xbf16, #tpu.memory_space<vmem>>, vector<16x32xbf16>
    %c0_5 = arith.constant 0 : index
    %c0_6 = arith.constant 0 : index
    %3 = vector.load %arg5[%c0_5, %c0_6] : memref<16x1xf32, #tpu.memory_space<vmem>>, vector<16x1xf32>
    %c0_7 = arith.constant 0 : index
    %c0_8 = arith.constant 0 : index
    %4 = vector.load %arg6[%c0_7, %c0_8] : memref<16x1xf32, #tpu.memory_space<vmem>>, vector<16x1xf32>
    %c0_9 = arith.constant 0 : index
    %c0_10 = arith.constant 0 : index
    %5 = vector.load %arg7[%c0_9, %c0_10] : memref<1x1xf32, #tpu.memory_space<vmem>>, vector<1x1xf32>
    %c0_11 = arith.constant 0 : index
    %c0_12 = arith.constant 0 : index
    %6 = vector.load %arg1[%c0_11, %c0_12] : memref<6x128xbf16, #tpu.memory_space<vmem>>, vector<6x128xbf16>
    %cst = arith.constant dense<0.000000e+00> : vector<32x128xf32>
    %7 = tpu.matmul %0, %6, %cst {dimension_numbers = #tpu.dot_dimension_numbers<[1], [0], [0], [1], [0, 0, 1, 1], [], []>} : vector<32x6xbf16>, vector<6x128xbf16>, vector<32x128xf32> -> vector<32x128xf32>
    %8 = vector.broadcast %1 : vector<32x1xf32> to vector<32x128xf32>
    %9 = arith.addf %7, %8 : vector<32x128xf32>
    %cst_13 = arith.constant 0.000000e+00 : f32
    %10 = vector.broadcast %cst_13 : f32 to vector<32x128xf32>
    %11 = arith.maximumf %9, %10 : vector<32x128xf32>
    %12 = arith.truncf %11 : vector<32x128xf32> to vector<32x128xbf16>
    %cst_14 = arith.constant dense<0.000000e+00> : vector<16x128xf32>
    %13 = tpu.matmul %2, %12, %cst_14 {dimension_numbers = #tpu.dot_dimension_numbers<[1], [0], [0], [1], [0, 0, 1, 1], [], []>} : vector<16x32xbf16>, vector<32x128xbf16>, vector<16x128xf32> -> vector<16x128xf32>
    %14 = vector.broadcast %3 : vector<16x1xf32> to vector<16x128xf32>
    %15 = arith.addf %13, %14 : vector<16x128xf32>
    %cst_15 = arith.constant 0.000000e+00 : f32
    %16 = vector.broadcast %cst_15 : f32 to vector<16x128xf32>
    %17 = arith.maximumf %15, %16 : vector<16x128xf32>
    %18 = vector.broadcast %4 : vector<16x1xf32> to vector<16x128xf32>
    %19 = arith.mulf %17, %18 : vector<16x128xf32>
    %cst_16 = arith.constant dense<0.000000e+00> : vector<128xf32>
    %20 = vector.multi_reduction <add>, %19, %cst_16 [0] : vector<16x128xf32> to vector<128xf32>
    %21 = vector.shape_cast %20 : vector<128xf32> to vector<1x128xf32>
    %22 = vector.broadcast %5 : vector<1x1xf32> to vector<1x128xf32>
    %23 = arith.addf %21, %22 : vector<1x128xf32>
    %24 = arith.negf %23 : vector<1x128xf32>
    %25 = math.exp %24 : vector<1x128xf32>
    %cst_17 = arith.constant 1.000000e+00 : f32
    %26 = vector.broadcast %cst_17 : f32 to vector<1x128xf32>
    %27 = arith.addf %26, %25 : vector<1x128xf32>
    %28 = arith.divf %26, %27 : vector<1x128xf32>
    %c0_18 = arith.constant 0 : index
    %c0_19 = arith.constant 0 : index
    %29 = vector.load %arg8[%c0_18, %c0_19] : memref<1x128xf32, #tpu.memory_space<vmem>>, vector<1x128xf32>
    tpu.vector_store %arg8[%c0_18, %c0_19], %28 {strides = array<i32>} : memref<1x128xf32, #tpu.memory_space<vmem>>, vector<1x128xf32>,
    return
  }
  func.func @transform_0(%arg0: i32) -> (i32, i32) {
    %c0_i32 = arith.constant 0 : i32
    %c0_i32_0 = arith.constant 0 : i32
    return %c0_i32, %arg0 : i32, i32
  }
  func.func @transform_1(%arg0: i32) -> (i32, i32) {
    %c0_i32 = arith.constant 0 : i32
    %c0_i32_0 = arith.constant 0 : i32
    %c0_i32_1 = arith.constant 0 : i32
    return %c0_i32, %c0_i32_0 : i32, i32
  }
  func.func @transform_2(%arg0: i32) -> (i32, i32) {
    %c0_i32 = arith.constant 0 : i32
    %c0_i32_0 = arith.constant 0 : i32
    %c0_i32_1 = arith.constant 0 : i32
    return %c0_i32, %c0_i32_0 : i32, i32
  }
  func.func @transform_3(%arg0: i32) -> (i32, i32) {
    %c0_i32 = arith.constant 0 : i32
    %c0_i32_0 = arith.constant 0 : i32
    %c0_i32_1 = arith.constant 0 : i32
    return %c0_i32, %c0_i32_0 : i32, i32
  }
  func.func @transform_4(%arg0: i32) -> (i32, i32) {
    %c0_i32 = arith.constant 0 : i32
    %c0_i32_0 = arith.constant 0 : i32
    %c0_i32_1 = arith.constant 0 : i32
    return %c0_i32, %c0_i32_0 : i32, i32
  }
  func.func @transform_5(%arg0: i32) -> (i32, i32) {
    %c0_i32 = arith.constant 0 : i32
    %c0_i32_0 = arith.constant 0 : i32
    %c0_i32_1 = arith.constant 0 : i32
    return %c0_i32, %c0_i32_0 : i32, i32
  }
  func.func @transform_6(%arg0: i32) -> (i32, i32) {
    %c0_i32 = arith.constant 0 : i32
    %c0_i32_0 = arith.constant 0 : i32
    %c0_i32_1 = arith.constant 0 : i32
    return %c0_i32, %c0_i32_0 : i32, i32
  }
  func.func @transform_7(%arg0: i32) -> (i32, i32) {
    %c0_i32 = arith.constant 0 : i32
    %c0_i32_0 = arith.constant 0 : i32
    return %c0_i32, %arg0 : i32, i32
  }
}

</mosaic_0001>

<llo_original>
// kernel: tpu_custom_call.1
$region0: #{tpu_custom_call.1}
  #allocation0 [shape = 'u32[]', space=smem, size = 0x4, offset = 0x4, fixed_abs, tag = 'smem constant byte address 0x4 - core index']
  #allocation1 [shape = 'u32[144,128]{1,0:T(1,128)}', space=vmem, size = 0x12000, scoped, tag = 'internal scratch']
  #allocation2 [shape = 'f32[1,1]{1,0:T(1,128)S(1)}', space=vmem, size = 0x200, scoped, tag = 'scoped memory for tpu_custom_call.1']
  %s0 = inlined_call_operand.vmem [shape: bf16[6,128], index: 0, kind: input, shape index: {}]
  %s1 = inlined_call_operand.vmem [shape: bf16[32,6], index: 1, kind: input, shape index: {}]
  %s2 = inlined_call_operand.vmem [shape: f32[32,1], index: 2, kind: input, shape index: {}]
  %s3 = inlined_call_operand.vmem [shape: bf16[16,32], index: 3, kind: input, shape index: {}]
  %s4 = inlined_call_operand.vmem [shape: f32[16,1], index: 4, kind: input, shape index: {}]
  %s5 = inlined_call_operand.vmem [shape: f32[16,1], index: 5, kind: input, shape index: {}]
  %s6 = inlined_call_operand.<no memory space> [shape: f32[1,1], index: 6, kind: input, shape index: {}]
  %s7 = inlined_call_operand.hbm [shape: f32[1,128], index: 7, kind: output, shape index: {}]
  %s8 = sld [smem:[#allocation0]]
  $region38: #{tpu_custom_call.1} parent=0
    _
  %s10 = ssub.s32 1, %s8
  %s11 = scalar_select 0, %s10, %s8
  %v12 = vstv %s6
  %13 = vst [vmem:[#allocation2] sm:$0x1] %v12
  $region1: #{tpu_custom_call.1} parent=0
    #allocation3 [shape = 'u8[512]{0}', space=vmem, size = 0x400, scoped, tag = 'output window, operand 0, single buffered']
    #allocation4 [shape = 's32[1]{0}', space=sflag, size = 0x4, scoped, tag = 'scoped memory for tpu_custom_call.1']
    %14 = vsyncpa [#allocation4], 0
    // Predicated region
    $region2: #{tpu_custom_call.1} parent=1 // pred_check
      _
    $region3: #{tpu_custom_call.1} parent=1 // pred_check_branch
      %16 = sbr.rel (0) target = $region5
    $region4: #{tpu_custom_call.1} parent=1 // pred_region
      %p17 = scmp.lt.s32.totalorder %s11, 0
      %s18 = scalar_select %p17, %s11, 0
      %s19 = smul.addr %s18, 4
      %s20 = scalar_lea.vmem %s0, %s19
    $region5: #{tpu_custom_call.1} parent=1 // pred_fallthru
      _
    // Predicated region
    $region6: #{tpu_custom_call.1} parent=1 // pred_check
      _
    $region7: #{tpu_custom_call.1} parent=1 // pred_check_branch
      %22 = sbr.rel (0) target = $region9
    $region8: #{tpu_custom_call.1} parent=1 // pred_region
      _
    $region9: #{tpu_custom_call.1} parent=1 // pred_fallthru
      _
    // Predicated region
    $region10: #{tpu_custom_call.1} parent=1 // pred_check
      _
    $region11: #{tpu_custom_call.1} parent=1 // pred_check_branch
      %24 = sbr.rel (0) target = $region13
    $region12: #{tpu_custom_call.1} parent=1 // pred_region
      _
    $region13: #{tpu_custom_call.1} parent=1 // pred_fallthru
      _
    // Predicated region
    $region14: #{tpu_custom_call.1} parent=1 // pred_check
      _
    $region15: #{tpu_custom_call.1} parent=1 // pred_check_branch
      %26 = sbr.rel (0) target = $region17
    $region16: #{tpu_custom_call.1} parent=1 // pred_region
      _
    $region17: #{tpu_custom_call.1} parent=1 // pred_fallthru
      _
    // Predicated region
    $region18: #{tpu_custom_call.1} parent=1 // pred_check
      _
    $region19: #{tpu_custom_call.1} parent=1 // pred_check_branch
      %28 = sbr.rel (0) target = $region21
    $region20: #{tpu_custom_call.1} parent=1 // pred_region
      _
    $region21: #{tpu_custom_call.1} parent=1 // pred_fallthru
      _
    // Predicated region
    $region22: #{tpu_custom_call.1} parent=1 // pred_check
      _
    $region23: #{tpu_custom_call.1} parent=1 // pred_check_branch
      %30 = sbr.rel (0) target = $region25
    $region24: #{tpu_custom_call.1} parent=1 // pred_region
      _
    $region25: #{tpu_custom_call.1} parent=1 // pred_fallthru
      _
    // Predicated region
    $region26: #{tpu_custom_call.1} parent=1 // pred_check
      _
    $region27: #{tpu_custom_call.1} parent=1 // pred_check_branch
      %32 = sbr.rel (0) target = $region29
    $region28: #{tpu_custom_call.1} parent=1 // pred_region
      _
    $region29: #{tpu_custom_call.1} parent=1 // pred_fallthru
      _
    %p33 = scmp.lt.s32.totalorder %s11, 0
    %s34 = scalar_select %p33, %s11, 0
    %s35 = smul.addr %s34, 4
    %s36 = scalar_lea.vmem %s0, %s35
    %p37 = scmp.lt.s32.totalorder %s11, 0
    %s38 = scalar_select %p37, %s11, 0
    %s39 = smul.addr %s38, 4
    %s40 = scalar_lea.vmem %s0, %s39
    %v42 = vld [vmem:[%s1] sm:$0xf]
    %v43 = vld [vmem:[%s1 + $0x4] sm:$0xf]
    %v44 = vld [vmem:[%s1 + $0x8] sm:$0xf]
    %v45 = vld [vmem:[%s1 + $0xc] sm:$0xf]
    %v46 = vld [vmem:[%s2] sm:$0xff]
    %v47 = vld [vmem:[%s2 + $0x8] sm:$0xff]
    %v48 = vld [vmem:[%s2 + $0x10] sm:$0xff]
    %v49 = vld [vmem:[%s2 + $0x18] sm:$0xff]
    %v50 = vld [vmem:[%s3] sm:$0xf]
    %v51 = vld [vmem:[%s3 + $0x4] sm:$0xf]
    %v52 = vld [vmem:[%s4] sm:$0xff]
    %v53 = vld [vmem:[%s4 + $0x8] sm:$0xff]
    %v54 = vld [vmem:[%s5] sm:$0xff]
    %v55 = vld [vmem:[%s5 + $0x8] sm:$0xff]
    %v56 = vld [vmem:[#allocation2] sm:$0x1]
    %v57 = vld [vmem:[%s40] sm:$0x7]
    %59 = vset.pattern.permute.xlu0 0
    %60 = vperm.xlu0 %59, %v46
    %v61 = vpop.permute.xlu0 %60
    %64 = vset.pattern.permute.xlu0 0
    %65 = vperm.xlu0 %64, %v47
    %v66 = vpop.permute.xlu0 %65
    %69 = vset.pattern.permute.xlu0 0
    %70 = vperm.xlu0 %69, %v48
    %v71 = vpop.permute.xlu0 %70
    %74 = vset.pattern.permute.xlu0 0
    %75 = vperm.xlu0 %74, %v49
    %v76 = vpop.permute.xlu0 %75
    %v82 = vunpack.c.l.b16 %v42
    %v83 = vunpack.c.l.b16 %v43
    %v84 = vunpack.c.l.b16 %v44
    %v85 = vunpack.c.l.b16 %v45
    %v86 = vpack.c.b16 %v83, %v82
    %v87 = vpack.c.b16 %v85, %v84
    %vm88 = vcmask 48128
    %v90 = vsel %vm88, %v86, 0
    %v93 = vsel %vm88, %v87, 0
    %vm95 = vcmask 1042432
    %v97 = vsel %vm95, %v57, 0
    %99 = vmatprep.subr.bf16.mxu0 0
    %100 = vmatpush1.bf16.msra.mxu0 %v97
    %101 = vmatprep.subr.bf16.mxu0 0
    %102 = vmatpush1.bf16.msra.mxu0 0
    %103 = vmatprep.subr.bf16.mxu0 0
    %104 = vmatpush1.bf16.msra.mxu0 0
    %105 = vmatprep.subr.bf16.mxu0 0
    %106 = vmatpush1.bf16.msra.mxu0 0
    %107 = vmatprep.subr.bf16.mxu0 0
    %108 = vmatpush1.bf16.msra.mxu0 0
    %109 = vmatprep.subr.bf16.mxu0 0
    %110 = vmatpush1.bf16.msra.mxu0 0
    %111 = vmatprep.subr.bf16.mxu0 0
    %112 = vmatpush1.bf16.msra.mxu0 0
    %113 = vmatprep.subr.bf16.mxu0 0
    %114 = vmatpush1.bf16.msra.mxu0 0
    %115 = vmatprep.subr.bf16.mxu0 0
    %116 = vmatpush1.bf16.msra.mxu0 0
    %117 = vmatprep.subr.bf16.mxu0 0
    %118 = vmatpush1.bf16.msra.mxu0 0
    %119 = vmatprep.subr.bf16.mxu0 0
    %120 = vmatpush1.bf16.msra.mxu0 0
    %121 = vmatprep.subr.bf16.mxu0 0
    %122 = vmatpush1.bf16.msra.mxu0 0
    %123 = vmatprep.subr.bf16.mxu0 0
    %124 = vmatpush1.bf16.msra.mxu0 0
    %125 = vmatprep.subr.bf16.mxu0 0
    %126 = vmatpush1.bf16.msra.mxu0 0
    %127 = vmatprep.subr.bf16.mxu0 0
    %128 = vmatpush1.bf16.msra.mxu0 0
    %129 = vmatprep.subr.bf16.mxu0 0
    %130 = vmatpush1.bf16.msra.mxu0 0
    %131 = vmatprep.mubr.bf16.mxu0 0
    %132 = vmatmul.mubr.bf16.gmra.mrb[0].mxu0 %v90
    %v133 = vpop.f32.mrb[0].mxu0
    %v134 = vadd.f32 %v61, %v133
    %v135 = vpop.f32.mrb[0].mxu0
    %v136 = vpop.f32.mrb[0].mxu0
    %v137 = vadd.f32 %v66, %v136
    %v138 = vpop.f32.mrb[0].mxu0
    %139 = vmatprep.mubr.bf16.mxu0 0
    %140 = vmatmul.mubr.bf16.gmra.mrb[0].mxu0 %v93
    %v141 = vpop.f32.mrb[0].mxu0
    %v142 = vadd.f32 %v71, %v141
    %v143 = vpop.f32.mrb[0].mxu0
    %v144 = vpop.f32.mrb[0].mxu0
    %v145 = vadd.f32 %v76, %v144
    %v146 = vpop.f32.mrb[0].mxu0
    %147 = vdwg.mxu0
    %v148 = vmax.f32 %v134, 0.0
    %v149 = vmax.f32 %v137, 0.0
    %v150 = vmax.f32 %v142, 0.0
    %v151 = vmax.f32 %v145, 0.0
    %v152 = vpack.c.bf16 %v149, %v148
    %v153 = vpack.c.bf16 %v151, %v150
    %155 = vset.pattern.permute.xlu0 0
    %156 = vperm.xlu0 %155, %v52
    %v157 = vpop.permute.xlu0 %156
    %160 = vset.pattern.permute.xlu0 0
    %161 = vperm.xlu0 %160, %v53
    %v162 = vpop.permute.xlu0 %161
    %v166 = vunpack.c.l.b16 %v50
    %v167 = vunpack.c.l.b16 %v51
    %v168 = vpack.c.b16 %v167, %v166
    %vm169 = vcmask 261120
    %v171 = vsel %vm169, %v168, 0
    %173 = vmatprep.subr.bf16.mxu0 0
    %174 = vmatpush1.bf16.msra.mxu0 %v152
    %175 = vmatprep.subr.bf16.mxu0 0
    %176 = vmatpush1.bf16.msra.mxu0 %v153
    %177 = vmatprep.subr.bf16.mxu0 0
    %178 = vmatpush1.bf16.msra.mxu0 0
    %179 = vmatprep.subr.bf16.mxu0 0
    %180 = vmatpush1.bf16.msra.mxu0 0
    %181 = vmatprep.subr.bf16.mxu0 0
    %182 = vmatpush1.bf16.msra.mxu0 0
    %183 = vmatprep.subr.bf16.mxu0 0
    %184 = vmatpush1.bf16.msra.mxu0 0
    %185 = vmatprep.subr.bf16.mxu0 0
    %186 = vmatpush1.bf16.msra.mxu0 0
    %187 = vmatprep.subr.bf16.mxu0 0
    %188 = vmatpush1.bf16.msra.mxu0 0
    %189 = vmatprep.subr.bf16.mxu0 0
    %190 = vmatpush1.bf16.msra.mxu0 0
    %191 = vmatprep.subr.bf16.mxu0 0
    %192 = vmatpush1.bf16.msra.mxu0 0
    %193 = vmatprep.subr.bf16.mxu0 0
    %194 = vmatpush1.bf16.msra.mxu0 0
    %195 = vmatprep.subr.bf16.mxu0 0
    %196 = vmatpush1.bf16.msra.mxu0 0
    %197 = vmatprep.subr.bf16.mxu0 0
    %198 = vmatpush1.bf16.msra.mxu0 0
    %199 = vmatprep.subr.bf16.mxu0 0
    %200 = vmatpush1.bf16.msra.mxu0 0
    %201 = vmatprep.subr.bf16.mxu0 0
    %202 = vmatpush1.bf16.msra.mxu0 0
    %203 = vmatprep.subr.bf16.mxu0 0
    %204 = vmatpush1.bf16.msra.mxu0 0
    %205 = vmatprep.mubr.bf16.mxu0 0
    %206 = vmatmul.mubr.bf16.gmra.mrb[0].mxu0 %v171
    %v207 = vpop.f32.mrb[0].mxu0
    %v208 = vadd.f32 %v157, %v207
    %v209 = vpop.f32.mrb[0].mxu0
    %v210 = vpop.f32.mrb[0].mxu0
    %v211 = vadd.f32 %v162, %v210
    %v212 = vpop.f32.mrb[0].mxu0
    %213 = vdwg.mxu0
    %v214 = vmax.f32 %v208, 0.0
    %v215 = vmax.f32 %v211, 0.0
    %217 = vset.pattern.permute.xlu0 0
    %218 = vperm.xlu0 %217, %v54
    %v219 = vpop.permute.xlu0 %218
    %222 = vset.pattern.permute.xlu0 0
    %223 = vperm.xlu0 %222, %v55
    %v224 = vpop.permute.xlu0 %223
    %v226 = vmul.f32 %v214, %v219
    %v227 = vmul.f32 %v215, %v224
    %v228 = vadd.f32 %v226, %v227
    %v229 = vrot.slane %v228, 4
    %v230 = vadd.f32 %v228, %v229
    %v231 = vrot.slane %v230, 2
    %v232 = vadd.f32 %v230, %v231
    %v233 = vrot.slane %v232, 1
    %v234 = vadd.f32 %v232, %v233
    %236 = vset.pattern.permute.xlu0 0
    %237 = vperm.xlu0 %236, %v56
    %v238 = vpop.permute.xlu0 %237
    %v240 = vlaneseq
    %v241 = vshrl.u32 %v240, 7
    %v242 = vsub.s32 0, %v241
    %v243 = vrot.slane %v238, %v242
    %v244 = vadd.f32 %v234, %v243
    %v245 = vxor.u32 %v244, 2147483648
    %v246 = vmul.f32 %v245, 1.442695
    %v247 = vpow.pop %v246
    %v248 = vadd.f32 %v247, 1.0
    %v249 = vrcp.pop %v248
    %v250 = vmul.f32 1.0, %v249
    %251 = vst [vmem:[#allocation3] sm:$0x1] %v250
    // Predicated region
    $region30: #{tpu_custom_call.1} parent=1 // pred_check
      _
    $region31: #{tpu_custom_call.1} parent=1 // pred_check_branch
      %253 = sbr.rel (0) target = $region33
    $region32: #{tpu_custom_call.1} parent=1 // pred_region
      %s255 = ssub.s32 16, 16
      %256 = vsyncadd [#allocation4], %s255
      %s257 = smul.addr %s11, 16
      %s258 = scalar_lea.hbm %s7, %s257
      %s260 = sshll.u32 [#allocation3], 4
      %s261 = int_to_ptr.vmem [resolvable:$true] %s260
      %263 = dma.vmem_to_hbm [thread:$0]  %s261, 16, %s258, [#allocation4]
    $region33: #{tpu_custom_call.1} parent=1 // pred_fallthru
      _
    // Predicated region
    $region34: #{tpu_custom_call.1} parent=1 // pred_check
      _
    $region35: #{tpu_custom_call.1} parent=1 // pred_check_branch
      %265 = sbr.rel (0) target = $region37
    $region36: #{tpu_custom_call.1} parent=1 // pred_region
      %266 = dma.done [#allocation4], 16
    $region37: #{tpu_custom_call.1} parent=1 // pred_fallthru
      _
    %267 = vsyncpa [#allocation4], 1

// kernel: tpu_custom_call.1
$region0: #{tpu_custom_call.1}
  #allocation0 [shape = 'u32[]', space=smem, size = 0x4, offset = 0x4, fixed_abs, tag = 'smem constant byte address 0x4 - core index']
  #allocation1 [shape = 'u32[144,128]{1,0:T(1,128)}', space=vmem, size = 0x12000, scoped, tag = 'internal scratch']
  #allocation2 [shape = 'f32[1,1]{1,0:T(1,128)S(1)}', space=vmem, size = 0x200, scoped, tag = 'scoped memory for tpu_custom_call.1']
  %s0 = inlined_call_operand.vmem [shape: bf16[6,128], index: 0, kind: input, shape index: {}]
  %s1 = inlined_call_operand.vmem [shape: bf16[32,6], index: 1, kind: input, shape index: {}]
  %s2 = inlined_call_operand.vmem [shape: f32[32,1], index: 2, kind: input, shape index: {}]
  %s3 = inlined_call_operand.vmem [shape: bf16[16,32], index: 3, kind: input, shape index: {}]
  %s4 = inlined_call_operand.vmem [shape: f32[16,1], index: 4, kind: input, shape index: {}]
  %s5 = inlined_call_operand.vmem [shape: f32[16,1], index: 5, kind: input, shape index: {}]
  %s6 = inlined_call_operand.<no memory space> [shape: f32[1,1], index: 6, kind: input, shape index: {}]
  %s7 = inlined_call_operand.hbm [shape: f32[1,128], index: 7, kind: output, shape index: {}]
  %s8 = sld [smem:[#allocation0]]
  $region38: #{tpu_custom_call.1} parent=0
    _
  %s10 = ssub.s32 1, %s8
  %s11 = scalar_select 0, %s10, %s8
  %v12 = vstv %s6
  %13 = vst [vmem:[#allocation2] sm:$0x1] %v12
  $region1: #{tpu_custom_call.1} parent=0
    #allocation3 [shape = 'u8[512]{0}', space=vmem, size = 0x400, scoped, tag = 'output window, operand 0, single buffered']
    #allocation4 [shape = 's32[1]{0}', space=sflag, size = 0x4, scoped, tag = 'scoped memory for tpu_custom_call.1']
    %14 = vsyncpa [#allocation4], 0
    // Predicated region
    $region2: #{tpu_custom_call.1} parent=1 // pred_check
      _
    $region3: #{tpu_custom_call.1} parent=1 // pred_check_branch
      %16 = sbr.rel (0) target = $region5
    $region4: #{tpu_custom_call.1} parent=1 // pred_region
      _
    $region5: #{tpu_custom_call.1} parent=1 // pred_fallthru
      _
    // Predicated region
    $region6: #{tpu_custom_call.1} parent=1 // pred_check
      _
    $region7: #{tpu_custom_call.1} parent=1 // pred_check_branch
      %18 = sbr.rel (0) target = $region9
    $region8: #{tpu_custom_call.1} parent=1 // pred_region
      _
    $region9: #{tpu_custom_call.1} parent=1 // pred_fallthru
      _
    // Predicated region
    $region10: #{tpu_custom_call.1} parent=1 // pred_check
      _
    $region11: #{tpu_custom_call.1} parent=1 // pred_check_branch
      %20 = sbr.rel (0) target = $region13
    $region12: #{tpu_custom_call.1} parent=1 // pred_region
      _
    $region13: #{tpu_custom_call.1} parent=1 // pred_fallthru
      _
    // Predicated region
    $region14: #{tpu_custom_call.1} parent=1 // pred_check
      _
    $region15: #{tpu_custom_call.1} parent=1 // pred_check_branch
      %22 = sbr.rel (0) target = $region17
    $region16: #{tpu_custom_call.1} parent=1 // pred_region
      _
    $region17: #{tpu_custom_call.1} parent=1 // pred_fallthru
      _
    // Predicated region
    $region18: #{tpu_custom_call.1} parent=1 // pred_check
      _
    $region19: #{tpu_custom_call.1} parent=1 // pred_check_branch
      %24 = sbr.rel (0) target = $region21
    $region20: #{tpu_custom_call.1} parent=1 // pred_region
      _
    $region21: #{tpu_custom_call.1} parent=1 // pred_fallthru
      _
    // Predicated region
    $region22: #{tpu_custom_call.1} parent=1 // pred_check
      _
    $region23: #{tpu_custom_call.1} parent=1 // pred_check_branch
      %26 = sbr.rel (0) target = $region25
    $region24: #{tpu_custom_call.1} parent=1 // pred_region
      _
    $region25: #{tpu_custom_call.1} parent=1 // pred_fallthru
      _
    // Predicated region
    $region26: #{tpu_custom_call.1} parent=1 // pred_check
      _
    $region27: #{tpu_custom_call.1} parent=1 // pred_check_branch
      %28 = sbr.rel (0) target = $region29
    $region28: #{tpu_custom_call.1} parent=1 // pred_region
      _
    $region29: #{tpu_custom_call.1} parent=1 // pred_fallthru
      _
    %v30 = vld [vmem:[%s1] sm:$0xf]
    %v31 = vld [vmem:[%s1 + $0x4] sm:$0xf]
    %v32 = vld [vmem:[%s1 + $0x8] sm:$0xf]
    %v33 = vld [vmem:[%s1 + $0xc] sm:$0xf]
    %v34 = vld [vmem:[%s2] sm:$0xff]
    %v35 = vld [vmem:[%s2 + $0x8] sm:$0xff]
    %v36 = vld [vmem:[%s2 + $0x10] sm:$0xff]
    %v37 = vld [vmem:[%s2 + $0x18] sm:$0xff]
    %v38 = vld [vmem:[%s3] sm:$0xf]
    %v39 = vld [vmem:[%s3 + $0x4] sm:$0xf]
    %v40 = vld [vmem:[%s4] sm:$0xff]
    %v41 = vld [vmem:[%s4 + $0x8] sm:$0xff]
    %v42 = vld [vmem:[%s5] sm:$0xff]
    %v43 = vld [vmem:[%s5 + $0x8] sm:$0xff]
    %v44 = vld [vmem:[#allocation2] sm:$0x1]
    %v45 = vld [vmem:[%s0] sm:$0x7]
    %47 = vset.pattern.permute.xlu0 0
    %48 = vperm.xlu0 %47, %v34
    %v49 = vpop.permute.xlu0 %48
    %52 = vset.pattern.permute.xlu0 0
    %53 = vperm.xlu0 %52, %v35
    %v54 = vpop.permute.xlu0 %53
    %57 = vset.pattern.permute.xlu0 0
    %58 = vperm.xlu0 %57, %v36
    %v59 = vpop.permute.xlu0 %58
    %62 = vset.pattern.permute.xlu0 0
    %63 = vperm.xlu0 %62, %v37
    %v64 = vpop.permute.xlu0 %63
    %v70 = vunpack.c.l.b16 %v30
    %v71 = vunpack.c.l.b16 %v31
    %v72 = vunpack.c.l.b16 %v32
    %v73 = vunpack.c.l.b16 %v33
    %v74 = vpack.c.b16 %v71, %v70
    %v75 = vpack.c.b16 %v73, %v72
    %vm76 = vcmask 48128
    %v78 = vsel %vm76, %v74, 0
    %v81 = vsel %vm76, %v75, 0
    %vm83 = vcmask 1042432
    %v85 = vsel %vm83, %v45, 0
    %87 = vmatprep.subr.bf16.mxu0 0
    %88 = vmatpush1.bf16.msra.mxu0 %v85
    %89 = vmatprep.subr.bf16.mxu0 0
    %90 = vmatpush1.bf16.msra.mxu0 0
    %91 = vmatprep.subr.bf16.mxu0 0
    %92 = vmatpush1.bf16.msra.mxu0 0
    %93 = vmatprep.subr.bf16.mxu0 0
    %94 = vmatpush1.bf16.msra.mxu0 0
    %95 = vmatprep.subr.bf16.mxu0 0
    %96 = vmatpush1.bf16.msra.mxu0 0
    %97 = vmatprep.subr.bf16.mxu0 0
    %98 = vmatpush1.bf16.msra.mxu0 0
    %99 = vmatprep.subr.bf16.mxu0 0
    %100 = vmatpush1.bf16.msra.mxu0 0
    %101 = vmatprep.subr.bf16.mxu0 0
    %102 = vmatpush1.bf16.msra.mxu0 0
    %103 = vmatprep.subr.bf16.mxu0 0
    %104 = vmatpush1.bf16.msra.mxu0 0
    %105 = vmatprep.subr.bf16.mxu0 0
    %106 = vmatpush1.bf16.msra.mxu0 0
    %107 = vmatprep.subr.bf16.mxu0 0
    %108 = vmatpush1.bf16.msra.mxu0 0
    %109 = vmatprep.subr.bf16.mxu0 0
    %110 = vmatpush1.bf16.msra.mxu0 0
    %111 = vmatprep.subr.bf16.mxu0 0
    %112 = vmatpush1.bf16.msra.mxu0 0
    %113 = vmatprep.subr.bf16.mxu0 0
    %114 = vmatpush1.bf16.msra.mxu0 0
    %115 = vmatprep.subr.bf16.mxu0 0
    %116 = vmatpush1.bf16.msra.mxu0 0
    %117 = vmatprep.subr.bf16.mxu0 0
    %118 = vmatpush1.bf16.msra.mxu0 0
    %119 = vmatprep.mubr.bf16.mxu0 0
    %120 = vmatmul.mubr.bf16.gmra.mrb[0].mxu0 %v78
    %v121 = vpop.f32.mrb[0].mxu0
    %v122 = vadd.f32 %v49, %v121
    %v123 = vpop.f32.mrb[0].mxu0
    %v124 = vpop.f32.mrb[0].mxu0
    %v125 = vadd.f32 %v54, %v124
    %v126 = vpop.f32.mrb[0].mxu0
    %127 = vmatprep.mubr.bf16.mxu0 0
    %128 = vmatmul.mubr.bf16.gmra.mrb[0].mxu0 %v81
    %v129 = vpop.f32.mrb[0].mxu0
    %v130 = vadd.f32 %v59, %v129
    %v131 = vpop.f32.mrb[0].mxu0
    %v132 = vpop.f32.mrb[0].mxu0
    %v133 = vadd.f32 %v64, %v132
    %v134 = vpop.f32.mrb[0].mxu0
    %135 = vdwg.mxu0
    %v136 = vmax.f32 %v122, 0.0
    %v137 = vmax.f32 %v125, 0.0
    %v138 = vmax.f32 %v130, 0.0
    %v139 = vmax.f32 %v133, 0.0
    %v140 = vpack.c.bf16 %v137, %v136
    %v141 = vpack.c.bf16 %v139, %v138
    %143 = vset.pattern.permute.xlu0 0
    %144 = vperm.xlu0 %143, %v40
    %v145 = vpop.permute.xlu0 %144
    %148 = vset.pattern.permute.xlu0 0
    %149 = vperm.xlu0 %148, %v41
    %v150 = vpop.permute.xlu0 %149
    %v154 = vunpack.c.l.b16 %v38
    %v155 = vunpack.c.l.b16 %v39
    %v156 = vpack.c.b16 %v155, %v154
    %vm157 = vcmask 261120
    %v159 = vsel %vm157, %v156, 0
    %161 = vmatprep.subr.bf16.mxu0 0
    %162 = vmatpush1.bf16.msra.mxu0 %v140
    %163 = vmatprep.subr.bf16.mxu0 0
    %164 = vmatpush1.bf16.msra.mxu0 %v141
    %165 = vmatprep.subr.bf16.mxu0 0
    %166 = vmatpush1.bf16.msra.mxu0 0
    %167 = vmatprep.subr.bf16.mxu0 0
    %168 = vmatpush1.bf16.msra.mxu0 0
    %169 = vmatprep.subr.bf16.mxu0 0
    %170 = vmatpush1.bf16.msra.mxu0 0
    %171 = vmatprep.subr.bf16.mxu0 0
    %172 = vmatpush1.bf16.msra.mxu0 0
    %173 = vmatprep.subr.bf16.mxu0 0
    %174 = vmatpush1.bf16.msra.mxu0 0
    %175 = vmatprep.subr.bf16.mxu0 0
    %176 = vmatpush1.bf16.msra.mxu0 0
    %177 = vmatprep.subr.bf16.mxu0 0
    %178 = vmatpush1.bf16.msra.mxu0 0
    %179 = vmatprep.subr.bf16.mxu0 0
    %180 = vmatpush1.bf16.msra.mxu0 0
    %181 = vmatprep.subr.bf16.mxu0 0
    %182 = vmatpush1.bf16.msra.mxu0 0
    %183 = vmatprep.subr.bf16.mxu0 0
    %184 = vmatpush1.bf16.msra.mxu0 0
    %185 = vmatprep.subr.bf16.mxu0 0
    %186 = vmatpush1.bf16.msra.mxu0 0
    %187 = vmatprep.subr.bf16.mxu0 0
    %188 = vmatpush1.bf16.msra.mxu0 0
    %189 = vmatprep.subr.bf16.mxu0 0
    %190 = vmatpush1.bf16.msra.mxu0 0
    %191 = vmatprep.subr.bf16.mxu0 0
    %192 = vmatpush1.bf16.msra.mxu0 0
    %193 = vmatprep.mubr.bf16.mxu0 0
    %194 = vmatmul.mubr.bf16.gmra.mrb[0].mxu0 %v159
    %v195 = vpop.f32.mrb[0].mxu0
    %v196 = vadd.f32 %v145, %v195
    %v197 = vpop.f32.mrb[0].mxu0
    %v198 = vpop.f32.mrb[0].mxu0
    %v199 = vadd.f32 %v150, %v198
    %v200 = vpop.f32.mrb[0].mxu0
    %201 = vdwg.mxu0
    %v202 = vmax.f32 %v196, 0.0
    %v203 = vmax.f32 %v199, 0.0
    %205 = vset.pattern.permute.xlu0 0
    %206 = vperm.xlu0 %205, %v42
    %v207 = vpop.permute.xlu0 %206
    %210 = vset.pattern.permute.xlu0 0
    %211 = vperm.xlu0 %210, %v43
    %v212 = vpop.permute.xlu0 %211
    %v214 = vmul.f32 %v202, %v207
    %v215 = vmul.f32 %v203, %v212
    %v216 = vadd.f32 %v214, %v215
    %v217 = vrot.slane %v216, 4
    %v218 = vadd.f32 %v216, %v217
    %v219 = vrot.slane %v218, 2
    %v220 = vadd.f32 %v218, %v219
    %v221 = vrot.slane %v220, 1
    %v222 = vadd.f32 %v220, %v221
    %224 = vset.pattern.permute.xlu0 0
    %225 = vperm.xlu0 %224, %v44
    %v226 = vpop.permute.xlu0 %225
    %v228 = vlaneseq
    %v229 = vshrl.u32 %v228, 7
    %v230 = vsub.s32 0, %v229
    %v231 = vrot.slane %v226, %v230
    %v232 = vadd.f32 %v222, %v231
    %v233 = vxor.u32 %v232, 2147483648
    %v234 = vmul.f32 %v233, 1.442695
    %v235 = vpow.pop %v234
    %v236 = vadd.f32 %v235, 1.0
    %v237 = vrcp.pop %v236
    %v238 = vmul.f32 1.0, %v237
    %239 = vst [vmem:[#allocation3] sm:$0x1] %v238
    // Predicated region
    $region30: #{tpu_custom_call.1} parent=1 // pred_check
      _
    $region31: #{tpu_custom_call.1} parent=1 // pred_check_branch
      %241 = sbr.rel (0) target = $region33
    $region32: #{tpu_custom_call.1} parent=1 // pred_region
      %s243 = ssub.s32 16, 16
      %244 = vsyncadd [#allocation4], %s243
      %s246 = sshll.u32 [#allocation3], 4
      %s247 = int_to_ptr.vmem [resolvable:$true] %s246
      %249 = dma.vmem_to_hbm [thread:$0]  %s247, 16, %s7, [#allocation4]
    $region33: #{tpu_custom_call.1} parent=1 // pred_fallthru
      _
    // Predicated region
    $region34: #{tpu_custom_call.1} parent=1 // pred_check
      _
    $region35: #{tpu_custom_call.1} parent=1 // pred_check_branch
      %251 = sbr.rel (0) target = $region37
    $region36: #{tpu_custom_call.1} parent=1 // pred_region
      %252 = dma.done [#allocation4], 16
    $region37: #{tpu_custom_call.1} parent=1 // pred_fallthru
      _
    %253 = vsyncpa [#allocation4], 1

</llo_original>
